<compile_context>
chip_gen: v7x
topology: tpu7x:2x2x1
jax: 0.10.0
libtpu: 0.0.40
codegen_flags: <defaults>
</compile_context>

<pallas_src>
import functools

import jax
import jax.numpy as jnp
from jax.experimental import pallas as pl
from jax.experimental.pallas import tpu as pltpu


def se_block_kernel(x_ref, w1_ref, b1_ref, w2_ref, b2_ref, o_ref, *, inv_hw):
    # x_ref: (TB, C, HWp) in the input dtype; params are small resident f32.
    x = x_ref[...]                                   # (TB, C, HWp)
    xf = x.astype(jnp.float32)

    # Squeeze: spatial sum (XLU lane reduce) * 1/HW.  Padded lanes are zero,
    # so dividing by the *true* HW keeps the mean unbiased.
    pooled = jnp.sum(xf, axis=-1, keepdims=True) * inv_hw                      # (TB, C, 1)

    # fc1: h[b, m] = sum_c pooled[b, c] * W1t[c, m] + b1[m]   (no MXU)
    h = jnp.sum(pooled * w1_ref[...][None], axis=1, keepdims=True) + b1_ref[...][None]
    h = jnp.maximum(h, 0.0)                                                    # (TB, 1, mid)

    # fc2: s[b, c] = sum_m h[b, m] * W2[c, m] + b2[c]         (no MXU)
    s = jnp.sum(h * w2_ref[...][None], axis=-1, keepdims=True) + b2_ref[...][None]
    s = jax.nn.sigmoid(s)                                                      # (TB, C, 1)

    # Scale in native dtype (bf16 path on v6e/v7x halves vector ld/st traffic;
    # for f32 inputs this is identical to an all-f32 path).
    o_ref[...] = (x * s.astype(x.dtype)).astype(o_ref.dtype)


def _vmem_capacity_bytes():
    try:
        info = pltpu.get_tpu_info()
        cap = getattr(info, "vmem_capacity_bytes", None)
        if cap:
            return int(cap)
    except Exception:
        pass
    return 64 * 1024 * 1024  # conservative default (v7x per-TC VMEM)


def se_block(x_nchw, fc1_w, fc1_b, fc2_w, fc2_b):
    """x_nchw: (B, C, H, W); fc1_w: (mid, C); fc1_b: (mid,); fc2_w: (C, mid); fc2_b: (C,)."""
    B, C, H, W = x_nchw.shape
    mid = fc1_w.shape[0]
    HW = H * W
    itemsize = jnp.dtype(x_nchw.dtype).itemsize

    # Lane-dense spatial axis: pad HW up to a multiple of 128 so every vector
    # store is an unmasked full-lane vst.  Pad lanes are zero and the pooled
    # mean divides by the true HW, so semantics are unchanged.
    HWp = ((HW + 127) // 128) * 128
    x = x_nchw.reshape(B, C, HW)                     # layout view only; no dtype cast
    if HWp != HW:
        x = jnp.pad(x, ((0, 0), (0, 0), (0, HWp - HW)))

    per_row_bytes = C * HWp * itemsize
    param_bytes = 2 * 4 * (C * mid + mid + C * mid + C)   # double-buffered f32 params

    # Generation-aware VMEM budget: 64 MiB parts (v7x) get a ~48 MiB cap to
    # leave compiler scratch headroom; 128 MiB parts (v5e/v6e) can use ~96 MiB.
    vmem_cap = _vmem_capacity_bytes()
    hard_cap = 48 * 1024 * 1024 if vmem_cap <= 64 * 1024 * 1024 else 96 * 1024 * 1024

    # Per-step batch tile TB: target ~0.5 MiB blocks (>=85% of HBM roofline per
    # measured Pallas data), but keep >= 4 grid steps when B allows it so both
    # v7x TensorCores get a double-buffered pipeline.
    tb = max(1, (512 * 1024) // max(1, per_row_bytes))
    tb = max(1, min(tb, B // 4)) if B >= 4 else 1
    tb = min(tb, B)
    while tb > 1 and 4 * tb * per_row_bytes + param_bytes + (1 << 20) > hard_cap:
        tb = max(1, tb // 2)
    while B % tb != 0:                               # no partial tail block
        tb -= 1
    # TODO(synk): if a single batch row (4 * per_row_bytes) exceeds hard_cap
    # (very large C*H*W), add an HW-tiling grid axis with a two-pass
    # reduce-then-scale scheme (pooled gate carried in a small VMEM scratch).

    vmem_needed = 4 * tb * per_row_bytes + param_bytes + (1 << 20)
    vmem_limit = min(max(vmem_needed, 32 * 1024 * 1024), hard_cap)

    # Tiny parameters: pre-arrange once in plain JAX so the kernel body is
    # pure broadcast-multiply + reduce.
    w1_t = fc1_w.T.astype(jnp.float32)               # (C, mid)
    b1 = fc1_b.reshape(1, mid).astype(jnp.float32)   # (1, mid)
    w2 = fc2_w.astype(jnp.float32)                   # (C, mid)
    b2 = fc2_b.reshape(C, 1).astype(jnp.float32)     # (C, 1)

    cost = pl.CostEstimate(
        flops=B * (2 * C * HW + 4 * C * mid),
        transcendentals=B * C,
        bytes_accessed=2 * B * C * HW * itemsize + w1_t.nbytes + b1.nbytes + w2.nbytes + b2.nbytes,
    )

    kernel = functools.partial(se_block_kernel, inv_hw=1.0 / HW)

    out = pl.pallas_call(
        kernel,
        out_shape=jax.ShapeDtypeStruct((B, C, HWp), x.dtype),
        grid=(B // tb,),
        in_specs=[
            pl.BlockSpec((tb, C, HWp), lambda b: (b, 0, 0)),  # x: TB batch rows per step
            pl.BlockSpec((C, mid), lambda b: (0, 0)),         # W1^T (resident)
            pl.BlockSpec((1, mid), lambda b: (0, 0)),         # b1
            pl.BlockSpec((C, mid), lambda b: (0, 0)),         # W2
            pl.BlockSpec((C, 1), lambda b: (0, 0)),           # b2
        ],
        out_specs=pl.BlockSpec((tb, C, HWp), lambda b: (b, 0, 0)),
        compiler_params=pltpu.CompilerParams(
            dimension_semantics=("parallel",),
            vmem_limit_bytes=vmem_limit,
        ),
        cost_estimate=cost,
    )(x, w1_t, b1, w2, b2)

    if HWp != HW:
        out = out[:, :, :HW]
    return out.reshape(B, C, H, W)


def se_block_ref(x_nchw, fc1_w, fc1_b, fc2_w, fc2_b):
    # Pure-JAX reference mirroring the PyTorch module.
    w = jnp.mean(x_nchw.astype(jnp.float32), axis=(2, 3))    # (B, C)
    w = w @ fc1_w.T + fc1_b                                  # (B, mid)
    w = jnp.maximum(w, 0.0)
    w = w @ fc2_w.T + fc2_b                                  # (B, C)
    w = jax.nn.sigmoid(w)
    return (x_nchw.astype(jnp.float32) * w[:, :, None, None]).astype(x_nchw.dtype)


if __name__ == "__main__":
    # Small shapes consistent with the module: channels=32, reduction=4 -> mid=8.
    B, C, H, W = 2, 32, 16, 16
    reduction = 4
    mid = C // reduction

    key = jax.random.PRNGKey(0)
    kx, k1w, k1b, k2w, k2b = jax.random.split(key, 5)
    x = jax.random.normal(kx, (B, C, H, W), dtype=jnp.float32)
    fc1_w = jax.random.normal(k1w, (mid, C), dtype=jnp.float32) * 0.1
    fc1_b = jax.random.normal(k1b, (mid,), dtype=jnp.float32) * 0.1
    fc2_w = jax.random.normal(k2w, (C, mid), dtype=jnp.float32) * 0.1
    fc2_b = jax.random.normal(k2b, (C,), dtype=jnp.float32) * 0.1

    y = se_block(x, fc1_w, fc1_b, fc2_w, fc2_b)
    jax.block_until_ready(y)

    y_ref = se_block_ref(x, fc1_w, fc1_b, fc2_w, fc2_b)
    assert jnp.allclose(y, y_ref, atol=1e-5, rtol=1e-5), "mismatch vs reference"

    print("KERNEL_OK")
</pallas_src>

<mosaic_0001>
module attributes {stable_mosaic.version = 11 : i64} {
  func.func @se_block_kernel(%arg0: i32, %arg1: memref<1x32x256xf32, #tpu.memory_space<vmem>>, %arg2: memref<32x8xf32, #tpu.memory_space<vmem>>, %arg3: memref<1x8xf32, #tpu.memory_space<vmem>>, %arg4: memref<32x8xf32, #tpu.memory_space<vmem>>, %arg5: memref<32x1xf32, #tpu.memory_space<vmem>>, %arg6: memref<1x32x256xf32, #tpu.memory_space<vmem>>) attributes {dimension_semantics = [#tpu.dimension_semantics<parallel>], iteration_bounds = array<i64: 2>, scalar_prefetch = 0 : i64, scratch_operands = 0 : i64, tpu.core_type = #tpu.core_type<tc>, window_params = [{transform_indices = @transform_0, window_bounds = array<i64: 1, 32, 256>}, {pipeline_mode = #tpu.pipeline_mode<synchronous>, transform_indices = @transform_1, window_bounds = array<i64: 32, 8>}, {pipeline_mode = #tpu.pipeline_mode<synchronous>, transform_indices = @transform_2, window_bounds = array<i64: 1, 8>}, {pipeline_mode = #tpu.pipeline_mode<synchronous>, transform_indices = @transform_3, window_bounds = array<i64: 32, 8>}, {pipeline_mode = #tpu.pipeline_mode<synchronous>, transform_indices = @transform_4, window_bounds = array<i64: 32, 1>}, {transform_indices = @transform_5, window_bounds = array<i64: 1, 32, 256>}]} {
    %c0 = arith.constant 0 : index
    %c0_0 = arith.constant 0 : index
    %c0_1 = arith.constant 0 : index
    %0 = vector.load %arg1[%c0, %c0_0, %c0_1] : memref<1x32x256xf32, #tpu.memory_space<vmem>>, vector<1x32x256xf32>
    %cst = arith.constant dense<0.000000e+00> : vector<1x32xf32>
    %1 = vector.multi_reduction <add>, %0, %cst [2] : vector<1x32x256xf32> to vector<1x32xf32>
    %2 = vector.shape_cast %1 : vector<1x32xf32> to vector<1x32x1xf32>
    %cst_2 = arith.constant 3.906250e-03 : f32
    %3 = vector.broadcast %cst_2 : f32 to vector<1x32x1xf32>
    %4 = arith.mulf %2, %3 : vector<1x32x1xf32>
    %c0_3 = arith.constant 0 : index
    %c0_4 = arith.constant 0 : index
    %5 = vector.load %arg2[%c0_3, %c0_4] : memref<32x8xf32, #tpu.memory_space<vmem>>, vector<32x8xf32>
    %6 = vector.shape_cast %5 : vector<32x8xf32> to vector<1x32x8xf32>
    %7 = vector.broadcast %4 : vector<1x32x1xf32> to vector<1x32x8xf32>
    %8 = arith.mulf %7, %6 : vector<1x32x8xf32>
    %cst_5 = arith.constant dense<0.000000e+00> : vector<1x8xf32>
    %9 = vector.multi_reduction <add>, %8, %cst_5 [1] : vector<1x32x8xf32> to vector<1x8xf32>
    %10 = vector.shape_cast %9 : vector<1x8xf32> to vector<1x1x8xf32>
    %c0_6 = arith.constant 0 : index
    %c0_7 = arith.constant 0 : index
    %11 = vector.load %arg3[%c0_6, %c0_7] : memref<1x8xf32, #tpu.memory_space<vmem>>, vector<1x8xf32>
    %12 = vector.shape_cast %11 : vector<1x8xf32> to vector<1x1x8xf32>
    %13 = arith.addf %10, %12 : vector<1x1x8xf32>
    %cst_8 = arith.constant 0.000000e+00 : f32
    %14 = vector.broadcast %cst_8 : f32 to vector<1x1x8xf32>
    %15 = arith.maximumf %13, %14 : vector<1x1x8xf32>
    %c0_9 = arith.constant 0 : index
    %c0_10 = arith.constant 0 : index
    %16 = vector.load %arg4[%c0_9, %c0_10] : memref<32x8xf32, #tpu.memory_space<vmem>>, vector<32x8xf32>
    %17 = vector.shape_cast %16 : vector<32x8xf32> to vector<1x32x8xf32>
    %18 = vector.broadcast %15 : vector<1x1x8xf32> to vector<1x32x8xf32>
    %19 = arith.mulf %18, %17 : vector<1x32x8xf32>
    %cst_11 = arith.constant dense<0.000000e+00> : vector<1x32xf32>
    %20 = vector.multi_reduction <add>, %19, %cst_11 [2] : vector<1x32x8xf32> to vector<1x32xf32>
    %21 = vector.shape_cast %20 : vector<1x32xf32> to vector<1x32x1xf32>
    %c0_12 = arith.constant 0 : index
    %c0_13 = arith.constant 0 : index
    %22 = vector.load %arg5[%c0_12, %c0_13] : memref<32x1xf32, #tpu.memory_space<vmem>>, vector<32x1xf32>
    %23 = vector.shape_cast %22 : vector<32x1xf32> to vector<1x32x1xf32>
    %24 = arith.addf %21, %23 : vector<1x32x1xf32>
    %25 = arith.negf %24 : vector<1x32x1xf32>
    %26 = math.exp %25 : vector<1x32x1xf32>
    %cst_14 = arith.constant 1.000000e+00 : f32
    %27 = vector.broadcast %cst_14 : f32 to vector<1x32x1xf32>
    %28 = arith.addf %27, %26 : vector<1x32x1xf32>
    %29 = arith.divf %27, %28 : vector<1x32x1xf32>
    %30 = vector.broadcast %29 : vector<1x32x1xf32> to vector<1x32x256xf32>
    %31 = arith.mulf %0, %30 : vector<1x32x256xf32>
    %c0_15 = arith.constant 0 : index
    %c0_16 = arith.constant 0 : index
    %c0_17 = arith.constant 0 : index
    %32 = vector.load %arg6[%c0_15, %c0_16, %c0_17] : memref<1x32x256xf32, #tpu.memory_space<vmem>>, vector<1x32x256xf32>
    tpu.vector_store %arg6[%c0_15, %c0_16, %c0_17], %31 {strides = array<i32>} : memref<1x32x256xf32, #tpu.memory_space<vmem>>, vector<1x32x256xf32>,
    return
  }
  func.func @transform_0(%arg0: i32) -> (i32, i32, i32) {
    %c0_i32 = arith.constant 0 : i32
    %c0_i32_0 = arith.constant 0 : i32
    %c0_i32_1 = arith.constant 0 : i32
    return %arg0, %c0_i32, %c0_i32_0 : i32, i32, i32
  }
  func.func @transform_1(%arg0: i32) -> (i32, i32) {
    %c0_i32 = arith.constant 0 : i32
    %c0_i32_0 = arith.constant 0 : i32
    %c0_i32_1 = arith.constant 0 : i32
    return %c0_i32, %c0_i32_0 : i32, i32
  }
  func.func @transform_2(%arg0: i32) -> (i32, i32) {
    %c0_i32 = arith.constant 0 : i32
    %c0_i32_0 = arith.constant 0 : i32
    %c0_i32_1 = arith.constant 0 : i32
    return %c0_i32, %c0_i32_0 : i32, i32
  }
  func.func @transform_3(%arg0: i32) -> (i32, i32) {
    %c0_i32 = arith.constant 0 : i32
    %c0_i32_0 = arith.constant 0 : i32
    %c0_i32_1 = arith.constant 0 : i32
    return %c0_i32, %c0_i32_0 : i32, i32
  }
  func.func @transform_4(%arg0: i32) -> (i32, i32) {
    %c0_i32 = arith.constant 0 : i32
    %c0_i32_0 = arith.constant 0 : i32
    %c0_i32_1 = arith.constant 0 : i32
    return %c0_i32, %c0_i32_0 : i32, i32
  }
  func.func @transform_5(%arg0: i32) -> (i32, i32, i32) {
    %c0_i32 = arith.constant 0 : i32
    %c0_i32_0 = arith.constant 0 : i32
    %c0_i32_1 = arith.constant 0 : i32
    return %arg0, %c0_i32, %c0_i32_0 : i32, i32, i32
  }
}

</mosaic_0001>

<llo_original>
// kernel: tpu_custom_call.1
$region0: #{tpu_custom_call.1}
  #allocation0 [shape = 'u32[]', space=smem, size = 0x4, offset = 0x4, fixed_abs, tag = 'smem constant byte address 0x4 - core index']
  #allocation1 [shape = 'u32[144,128]{1,0:T(1,128)}', space=vmem, size = 0x12000, scoped, tag = 'internal scratch']
  %s0 = inlined_call_operand.hbm [shape: f32[2,32,256], index: 0, kind: input, shape index: {}]
  %s1 = inlined_call_operand.vmem [shape: f32[32,8], index: 1, kind: input, shape index: {}]
  %s2 = inlined_call_operand.vmem [shape: f32[1,8], index: 2, kind: input, shape index: {}]
  %s3 = inlined_call_operand.vmem [shape: f32[32,8], index: 3, kind: input, shape index: {}]
  %s4 = inlined_call_operand.vmem [shape: f32[32,1], index: 4, kind: input, shape index: {}]
  %s5 = inlined_call_operand.hbm [shape: f32[2,32,256], index: 5, kind: output, shape index: {}]
  %s6 = sld [smem:[#allocation0]]
  $region57: #{tpu_custom_call.1} parent=0
    _
  %s8 = ssub.s32 1, %s6
  %s9 = scalar_select 0, %s8, %s6
  $region1: #{tpu_custom_call.1} parent=0
    #allocation2 [shape = 'u8[65536]{0}', space=vmem, size = 0x10000, scoped, tag = 'input window, operand 0']
    #allocation3 [shape = 's32[2]{0}', space=sflag, size = 0x8, scoped, tag = 'scoped memory for tpu_custom_call.1']
    #allocation4 [shape = 's32[2]{0}', space=sflag, size = 0x8, scoped, tag = 'scoped memory for tpu_custom_call.1']
    #allocation5 [shape = 'u8[65536]{0}', space=vmem, size = 0x10000, scoped, tag = 'output window, operand 0']
    %10 = vsyncpa [#allocation3], 0
    %s11 = scalar_lea.sflag [#allocation3], 1
    %12 = vsyncpa %s11, 0
    %13 = vsyncpa [#allocation4], 0
    %s14 = scalar_lea.sflag [#allocation4], 1
    %15 = vsyncpa %s14, 0
    loop: start=0, step=1, limit=4
    $region2: #{tpu_custom_call.1} parent=1 // loop_pre_header
      _
    $region3: #{tpu_custom_call.1} parent=1 // loop_header
      %s17 = sphi 0, %s21
      %p18 = scmp.ge.s32.totalorder %s17, 4
      %s27 = sphi 0, %s29
      %s30 = sphi 0, %s27
      %s31 = sphi 0, %s30
      %s47 = sphi 0, %s31
      %s51 = sphi 0, %s51
      %s53 = sphi 0, %s51
      %s54 = sphi 0, %s53
      %s68 = sphi 0, %s54
      %s72 = sphi 0, %s72
      %s74 = sphi 0, %s72
      %s75 = sphi 0, %s74
      %s89 = sphi 0, %s75
      %s93 = sphi 0, %s93
      %s95 = sphi 0, %s93
      %s96 = sphi 0, %s95
      %s110 = sphi 0, %s96
      %s114 = sphi 0, %s114
      %s116 = sphi 0, %s114
      %s117 = sphi 0, %s116
      %s131 = sphi 0, %s117
      %s137 = sphi 0, %s139
      %s140 = sphi 0, %s137
      %s141 = sphi 0, %s140
      %s157 = sphi 0, %s141
    $region4: #{tpu_custom_call.1} parent=1 // loop_header_branch
      %20 = sbr.rel (%p18) target = $region8
    $region5: #{tpu_custom_call.1} parent=1 // loop_body
      %s22 = ssub.s32 %s17, 1
      %s23 = ssub.s32 %s17, 2
      %s24 = sadd.s32 %s17, 1
      %s25 = ssub.s32 %s17, %s24
      %p26 = scmp.eq.s32.totalorder %s25, 0
      %s28 = sadd.s32 %s27, 1
      %s29 = scalar_select %p26, %s27, %s28
      %p32 = pneg %p26
      %p33 = scmp.eq.s32.totalorder %s17, 1
      %p34 = por %p32, %p33
      %p35 = scmp.ne.s32.totalorder %s27, %s30
      %p36 = scmp.eq.s32.totalorder %s17, 0
      %p37 = por %p35, %p36
      %p38 = scmp.ne.s32.totalorder %s27, %s30
      %p39 = scmp.eq.s32.totalorder %s22, 1
      %p40 = por %p38, %p39
      %p41 = scmp.ne.s32.totalorder %s30, %s31
      %p42 = scmp.eq.s32.totalorder %s22, 0
      %p43 = por %p41, %p42
      %p44 = scmp.ne.s32.totalorder %s30, %s31
      %p45 = scmp.eq.s32.totalorder %s23, 1
      %p46 = por %p44, %p45
      %p48 = scmp.ne.s32.totalorder %s31, %s47
      %p49 = scmp.eq.s32.totalorder %s23, 0
      %p50 = por %p48, %p49
      %s52 = sadd.s32 %s51, 1
      %p55 = scmp.eq.s32.totalorder %s17, 1
      %p56 = scmp.ne.s32.totalorder %s51, %s53
      %p57 = scmp.eq.s32.totalorder %s17, 0
      %p58 = por %p56, %p57
      %p59 = scmp.ne.s32.totalorder %s51, %s53
      %p60 = scmp.eq.s32.totalorder %s22, 1
      %p61 = por %p59, %p60
      %p62 = scmp.ne.s32.totalorder %s53, %s54
      %p63 = scmp.eq.s32.totalorder %s22, 0
      %p64 = por %p62, %p63
      %p65 = scmp.ne.s32.totalorder %s53, %s54
      %p66 = scmp.eq.s32.totalorder %s23, 1
      %p67 = por %p65, %p66
      %p69 = scmp.ne.s32.totalorder %s54, %s68
      %p70 = scmp.eq.s32.totalorder %s23, 0
      %p71 = por %p69, %p70
      %s73 = sadd.s32 %s72, 1
      %p76 = scmp.eq.s32.totalorder %s17, 1
      %p77 = scmp.ne.s32.totalorder %s72, %s74
      %p78 = scmp.eq.s32.totalorder %s17, 0
      %p79 = por %p77, %p78
      %p80 = scmp.ne.s32.totalorder %s72, %s74
      %p81 = scmp.eq.s32.totalorder %s22, 1
      %p82 = por %p80, %p81
      %p83 = scmp.ne.s32.totalorder %s74, %s75
      %p84 = scmp.eq.s32.totalorder %s22, 0
      %p85 = por %p83, %p84
      %p86 = scmp.ne.s32.totalorder %s74, %s75
      %p87 = scmp.eq.s32.totalorder %s23, 1
      %p88 = por %p86, %p87
      %p90 = scmp.ne.s32.totalorder %s75, %s89
      %p91 = scmp.eq.s32.totalorder %s23, 0
      %p92 = por %p90, %p91
      %s94 = sadd.s32 %s93, 1
      %p97 = scmp.eq.s32.totalorder %s17, 1
      %p98 = scmp.ne.s32.totalorder %s93, %s95
      %p99 = scmp.eq.s32.totalorder %s17, 0
      %p100 = por %p98, %p99
      %p101 = scmp.ne.s32.totalorder %s93, %s95
      %p102 = scmp.eq.s32.totalorder %s22, 1
      %p103 = por %p101, %p102
      %p104 = scmp.ne.s32.totalorder %s95, %s96
      %p105 = scmp.eq.s32.totalorder %s22, 0
      %p106 = por %p104, %p105
      %p107 = scmp.ne.s32.totalorder %s95, %s96
      %p108 = scmp.eq.s32.totalorder %s23, 1
      %p109 = por %p107, %p108
      %p111 = scmp.ne.s32.totalorder %s96, %s110
      %p112 = scmp.eq.s32.totalorder %s23, 0
      %p113 = por %p111, %p112
      %s115 = sadd.s32 %s114, 1
      %p118 = scmp.eq.s32.totalorder %s17, 1
      %p119 = scmp.ne.s32.totalorder %s114, %s116
      %p120 = scmp.eq.s32.totalorder %s17, 0
      %p121 = por %p119, %p120
      %p122 = scmp.ne.s32.totalorder %s114, %s116
      %p123 = scmp.eq.s32.totalorder %s22, 1
      %p124 = por %p122, %p123
      %p125 = scmp.ne.s32.totalorder %s116, %s117
      %p126 = scmp.eq.s32.totalorder %s22, 0
      %p127 = por %p125, %p126
      %p128 = scmp.ne.s32.totalorder %s116, %s117
      %p129 = scmp.eq.s32.totalorder %s23, 1
      %p130 = por %p128, %p129
      %p132 = scmp.ne.s32.totalorder %s117, %s131
      %p133 = scmp.eq.s32.totalorder %s23, 0
      %p134 = por %p132, %p133
      %s135 = ssub.s32 %s17, %s24
      %p136 = scmp.eq.s32.totalorder %s135, 0
      %s138 = sadd.s32 %s137, 1
      %s139 = scalar_select %p136, %s137, %s138
      %p142 = pneg %p136
      %p143 = scmp.eq.s32.totalorder %s17, 1
      %p144 = por %p142, %p143
      %p145 = scmp.ne.s32.totalorder %s137, %s140
      %p146 = scmp.eq.s32.totalorder %s17, 0
      %p147 = por %p145, %p146
      %p148 = scmp.ne.s32.totalorder %s137, %s140
      %p149 = scmp.eq.s32.totalorder %s22, 1
      %p150 = por %p148, %p149
      %p151 = scmp.ne.s32.totalorder %s140, %s141
      %p152 = scmp.eq.s32.totalorder %s22, 0
      %p153 = por %p151, %p152
      %p154 = scmp.ne.s32.totalorder %s140, %s141
      %p155 = scmp.eq.s32.totalorder %s23, 1
      %p156 = por %p154, %p155
      %p158 = scmp.ne.s32.totalorder %s141, %s157
      %p159 = scmp.eq.s32.totalorder %s23, 0
      %p160 = por %p158, %p159
      %p161 = scmp.le.s32.totalorder 1, %s17
      %p162 = scmp.lt.s32.totalorder %s17, 3
      %p163 = pnand %p161, %p162
      %p164 = pneg %p163
      // Predicated region
      $region9: #{tpu_custom_call.1} parent=5 // pred_check
        _
      $region10: #{tpu_custom_call.1} parent=5 // pred_check_branch
        %166 = sbr.rel (%p163) target = $region12
      $region11: #{tpu_custom_call.1} parent=5 // pred_region
        %s167 = ssub.s32 %s17, 1
        // Predicated region
        $region13: #{tpu_custom_call.1} parent=11 // pred_check
          %p168 = pneg %p64
        $region14: #{tpu_custom_call.1} parent=11 // pred_check_branch
          %170 = sbr.rel (%p168) target = $region16
        $region15: #{tpu_custom_call.1} parent=11 // pred_region
          _
        $region16: #{tpu_custom_call.1} parent=11 // pred_fallthru
          _
        // Predicated region
        $region17: #{tpu_custom_call.1} parent=11 // pred_check
          %p171 = pneg %p85
        $region18: #{tpu_custom_call.1} parent=11 // pred_check_branch
          %173 = sbr.rel (%p171) target = $region20
        $region19: #{tpu_custom_call.1} parent=11 // pred_region
          _
        $region20: #{tpu_custom_call.1} parent=11 // pred_fallthru
          _
        // Predicated region
        $region21: #{tpu_custom_call.1} parent=11 // pred_check
          %p174 = pneg %p106
        $region22: #{tpu_custom_call.1} parent=11 // pred_check_branch
          %176 = sbr.rel (%p174) target = $region24
        $region23: #{tpu_custom_call.1} parent=11 // pred_region
          _
        $region24: #{tpu_custom_call.1} parent=11 // pred_fallthru
          _
        // Predicated region
        $region25: #{tpu_custom_call.1} parent=11 // pred_check
          %p177 = pneg %p127
        $region26: #{tpu_custom_call.1} parent=11 // pred_check_branch
          %179 = sbr.rel (%p177) target = $region28
        $region27: #{tpu_custom_call.1} parent=11 // pred_region
          _
        $region28: #{tpu_custom_call.1} parent=11 // pred_fallthru
          _
      $region12: #{tpu_custom_call.1} parent=5 // pred_fallthru
        _
      %p180 = scmp.lt.s32.totalorder %s17, 2
      // Predicated region
      $region29: #{tpu_custom_call.1} parent=5 // pred_check
        %p181 = pneg %p180
      $region30: #{tpu_custom_call.1} parent=5 // pred_check_branch
        %183 = sbr.rel (%p181) target = $region32
      $region31: #{tpu_custom_call.1} parent=5 // pred_region
        // Predicated region
        $region33: #{tpu_custom_call.1} parent=31 // pred_check
          %p184 = pneg %p37
        $region34: #{tpu_custom_call.1} parent=31 // pred_check_branch
          %186 = sbr.rel (%p184) target = $region36
        $region35: #{tpu_custom_call.1} parent=31 // pred_region
          %s187 = sand.u32 %s27, 1
          %s188 = scalar_lea.sflag [#allocation3], %s187
          %s189 = sand.u32 %s27, 1
          %s190 = smul.addr %s189, 64
          %s191 = scalar_lea.vmem [#allocation2], %s190
          %s193 = ssub.s32 1024, 1024
          %194 = vsyncadd %s188, %s193
          %s195 = smul.addr %s17, 8
          %s196 = smul.addr %s195, 128
          %s197 = scalar_lea.hbm %s0, %s196
          %s198 = sshll.u32 %s191, 4
          %s199 = int_to_ptr.vmem [resolvable:$true] %s198
          %204 = dma.hbm_to_vmem [thread:$0]  %s197, 1024, %s199, %s188, 256, 256, 16
        $region36: #{tpu_custom_call.1} parent=31 // pred_fallthru
          _
      $region32: #{tpu_custom_call.1} parent=5 // pred_fallthru
        _
      %p205 = scmp.le.s32.totalorder 1, %s17
      %p206 = scmp.lt.s32.totalorder %s17, 3
      %p207 = pnand %p205, %p206
      %p208 = pneg %p207
      // Predicated region
      $region37: #{tpu_custom_call.1} parent=5 // pred_check
        _
      $region38: #{tpu_custom_call.1} parent=5 // pred_check_branch
        %210 = sbr.rel (%p207) target = $region40
      $region39: #{tpu_custom_call.1} parent=5 // pred_region
        %s211 = ssub.s32 %s17, 1
        %s212 = sand.u32 %s30, 1
        %s213 = scalar_lea.sflag [#allocation3], %s212
        %s214 = sand.u32 %s30, 1
        %s215 = smul.addr %s214, 64
        %s216 = scalar_lea.vmem [#allocation2], %s215
        // Predicated region
        $region41: #{tpu_custom_call.1} parent=39 // pred_check
          %p217 = pneg %p43
        $region42: #{tpu_custom_call.1} parent=39 // pred_check_branch
          %219 = sbr.rel (%p217) target = $region44
        $region43: #{tpu_custom_call.1} parent=39 // pred_region
          %220 = dma.done %s213, 1024
        $region44: #{tpu_custom_call.1} parent=39 // pred_fallthru
          _
        %s221 = sand.u32 %s30, 1
        %s222 = scalar_lea.sflag [#allocation3], %s221
        %s223 = sand.u32 %s30, 1
        %s224 = smul.addr %s223, 64
        %s225 = scalar_lea.vmem [#allocation2], %s224
        %p226 = pneg %p43
        %p227 = pneg %p40
        %p228 = pneg %p64
        %p229 = pneg %p61
        %p230 = pneg %p85
        %p231 = pneg %p82
        %p232 = pneg %p106
        %p233 = pneg %p103
        %p234 = pneg %p127
        %p235 = pneg %p124
        %p236 = pneg %p153
        %p237 = pneg %p150
        %s238 = sand.u32 %s140, 1
        %s239 = scalar_lea.sflag [#allocation4], %s238
        %s240 = sand.u32 %s140, 1
        %s241 = smul.addr %s240, 64
        %s242 = scalar_lea.vmem [#allocation5], %s241
        %v243 = vld [vmem:[%s216] sm:$0xff]
        %v244 = vld [vmem:[%s216 + $0x8] sm:$0xff]
        %v245 = vld [vmem:[%s216 + $0x10] sm:$0xff]
        %v246 = vld [vmem:[%s216 + $0x18] sm:$0xff]
        %v247 = vld [vmem:[%s216 + $0x20] sm:$0xff]
        %v248 = vld [vmem:[%s216 + $0x28] sm:$0xff]
        %v249 = vld [vmem:[%s216 + $0x30] sm:$0xff]
        %v250 = vld [vmem:[%s216 + $0x38] sm:$0xff]
        %v251 = vadd.f32 %v243, %v244
        %252 = vadd.xlane.f32.xlu0 %v251
        %v253 = vpop.xlane.xlu0 %252
        %v254 = vadd.f32 %v245, %v246
        %255 = vadd.xlane.f32.xlu0 %v254
        %v256 = vpop.xlane.xlu0 %255
        %v257 = vadd.f32 %v247, %v248
        %258 = vadd.xlane.f32.xlu0 %v257
        %v259 = vpop.xlane.xlu0 %258
        %v260 = vadd.f32 %v249, %v250
        %261 = vadd.xlane.f32.xlu0 %v260
        %v262 = vpop.xlane.xlu0 %261
        %v263 = vmul.f32 %v253, 0.00390625
        %v264 = vmul.f32 %v256, 0.00390625
        %v265 = vmul.f32 %v259, 0.00390625
        %v266 = vmul.f32 %v262, 0.00390625
        %v267 = vld [vmem:[%s1] sm:$0xff]
        %v268 = vld [vmem:[%s1 + $0x8] sm:$0xff]
        %v269 = vld [vmem:[%s1 + $0x10] sm:$0xff]
        %v270 = vld [vmem:[%s1 + $0x18] sm:$0xff]
        %v271 = vmul.f32 %v263, %v267
        %v272 = vmul.f32 %v264, %v268
        %v273 = vmul.f32 %v265, %v269
        %v274 = vmul.f32 %v266, %v270
        %vm275 = vcmask 64512
        %v276 = vsel %vm275, %v271, 0.0
        %v277 = vsel %vm275, %v272, 0.0
        %v278 = vadd.f32 %v276, %v277
        %v279 = vsel %vm275, %v273, 0.0
        %v280 = vadd.f32 %v278, %v279
        %v281 = vsel %vm275, %v274, 0.0
        %v282 = vadd.f32 %v280, %v281
        %v283 = vrot.slane %v282, 4
        %v284 = vadd.f32 %v282, %v283
        %v285 = vrot.slane %v284, 2
        %v286 = vadd.f32 %v284, %v285
        %v287 = vrot.slane %v286, 1
        %v288 = vadd.f32 %v286, %v287
        %v289 = vld [vmem:[%s2] sm:$0x1]
        %v290 = vadd.f32 %v288, %v289
        %v291 = vmax.f32 %v290, 0.0
        %v292 = vld [vmem:[%s3] sm:$0xff]
        %v293 = vld [vmem:[%s3 + $0x8] sm:$0xff]
        %v294 = vld [vmem:[%s3 + $0x10] sm:$0xff]
        %v295 = vld [vmem:[%s3 + $0x18] sm:$0xff]
        %v296 = vlaneseq
        %v297 = vshrl.u32 %v296, 7
        %v298 = vsub.s32 0, %v297
        %v299 = vrot.slane %v291, %v298
        %v300 = vmul.f32 %v299, %v292
        %v301 = vmul.f32 %v299, %v293
        %v302 = vmul.f32 %v299, %v294
        %v303 = vmul.f32 %v299, %v295
        %v304 = vsel %vm275, %v300, 0.0
        %305 = vadd.xlane.f32.xlu0 %v304
        %v306 = vpop.xlane.xlu0 %305
        %v307 = vsel %vm275, %v301, 0.0
        %308 = vadd.xlane.f32.xlu0 %v307
        %v309 = vpop.xlane.xlu0 %308
        %v310 = vsel %vm275, %v302, 0.0
        %311 = vadd.xlane.f32.xlu0 %v310
        %v312 = vpop.xlane.xlu0 %311
        %v313 = vsel %vm275, %v303, 0.0
        %314 = vadd.xlane.f32.xlu0 %v313
        %v315 = vpop.xlane.xlu0 %314
        %v316 = vld [vmem:[%s4] sm:$0xff]
        %v317 = vld [vmem:[%s4 + $0x8] sm:$0xff]
        %v318 = vld [vmem:[%s4 + $0x10] sm:$0xff]
        %v319 = vld [vmem:[%s4 + $0x18] sm:$0xff]
        %v320 = vadd.f32 %v306, %v316
        %v321 = vadd.f32 %v309, %v317
        %v322 = vadd.f32 %v312, %v318
        %v323 = vadd.f32 %v315, %v319
        %v324 = vxor.u32 %v320, 2147483648
        %v325 = vxor.u32 %v321, 2147483648
        %v326 = vxor.u32 %v322, 2147483648
        %v327 = vxor.u32 %v323, 2147483648
        %v328 = vmul.f32 %v324, 1.442695
        %v329 = vpow.pop %v328
        %v330 = vmul.f32 %v325, 1.442695
        %v331 = vpow.pop %v330
        %v332 = vmul.f32 %v326, 1.442695
        %v333 = vpow.pop %v332
        %v334 = vmul.f32 %v327, 1.442695
        %v335 = vpow.pop %v334
        %v336 = vadd.f32 %v329, 1.0
        %v337 = vadd.f32 %v331, 1.0
        %v338 = vadd.f32 %v333, 1.0
        %v339 = vadd.f32 %v335, 1.0
        %v340 = vrcp.pop %v336
        %v341 = vmul.f32 1.0, %v340
        %v342 = vrcp.pop %v337
        %v343 = vmul.f32 1.0, %v342
        %v344 = vrcp.pop %v338
        %v345 = vmul.f32 1.0, %v344
        %v346 = vrcp.pop %v339
        %v347 = vmul.f32 1.0, %v346
        %349 = vset.pattern.permute.xlu0 0
        %350 = vperm.xlu0 %349, %v341
        %v351 = vpop.permute.xlu0 %350
        %354 = vset.pattern.permute.xlu0 0
        %355 = vperm.xlu0 %354, %v343
        %v356 = vpop.permute.xlu0 %355
        %359 = vset.pattern.permute.xlu0 0
        %360 = vperm.xlu0 %359, %v345
        %v361 = vpop.permute.xlu0 %360
        %364 = vset.pattern.permute.xlu0 0
        %365 = vperm.xlu0 %364, %v347
        %v366 = vpop.permute.xlu0 %365
        %v368 = vmul.f32 %v243, %v351
        %v369 = vmul.f32 %v244, %v351
        %v370 = vmul.f32 %v245, %v356
        %v371 = vmul.f32 %v246, %v356
        %v372 = vmul.f32 %v247, %v361
        %v373 = vmul.f32 %v248, %v361
        %v374 = vmul.f32 %v249, %v366
        %v375 = vmul.f32 %v250, %v366
        %376 = vst [vmem:[%s242] sm:$0xff] %v368
        %377 = vst [vmem:[%s242 + $0x8] sm:$0xff] %v369
        %378 = vst [vmem:[%s242 + $0x10] sm:$0xff] %v370
        %379 = vst [vmem:[%s242 + $0x18] sm:$0xff] %v371
        %380 = vst [vmem:[%s242 + $0x20] sm:$0xff] %v372
        %381 = vst [vmem:[%s242 + $0x28] sm:$0xff] %v373
        %382 = vst [vmem:[%s242 + $0x30] sm:$0xff] %v374
        %383 = vst [vmem:[%s242 + $0x38] sm:$0xff] %v375
        %s384 = sand.u32 %s140, 1
        %s385 = scalar_lea.sflag [#allocation4], %s384
        %s386 = sand.u32 %s140, 1
        %s387 = smul.addr %s386, 64
        %s388 = scalar_lea.vmem [#allocation5], %s387
        // Predicated region
        $region45: #{tpu_custom_call.1} parent=39 // pred_check
          %p389 = pneg %p150
        $region46: #{tpu_custom_call.1} parent=39 // pred_check_branch
          %391 = sbr.rel (%p389) target = $region48
        $region47: #{tpu_custom_call.1} parent=39 // pred_region
          %s393 = ssub.s32 1024, 1024
          %394 = vsyncadd %s385, %s393
          %s395 = smul.addr %s22, 8
          %s396 = smul.addr %s395, 128
          %s397 = scalar_lea.hbm %s5, %s396
          %s398 = sshll.u32 %s388, 4
          %s399 = int_to_ptr.vmem [resolvable:$true] %s398
          %404 = dma.vmem_to_hbm [thread:$0]  %s399, 1024, %s397, %s385, 256, 256, 16
        $region48: #{tpu_custom_call.1} parent=39 // pred_fallthru
          _
      $region40: #{tpu_custom_call.1} parent=5 // pred_fallthru
        _
      %p405 = scmp.le.s32.totalorder 2, %s17
      // Predicated region
      $region49: #{tpu_custom_call.1} parent=5 // pred_check
        %p406 = pneg %p405
      $region50: #{tpu_custom_call.1} parent=5 // pred_check_branch
        %408 = sbr.rel (%p406) target = $region52
      $region51: #{tpu_custom_call.1} parent=5 // pred_region
        %s409 = ssub.s32 %s17, 2
        // Predicated region
        $region53: #{tpu_custom_call.1} parent=51 // pred_check
          %p410 = pneg %p156
        $region54: #{tpu_custom_call.1} parent=51 // pred_check_branch
          %412 = sbr.rel (%p410) target = $region56
        $region55: #{tpu_custom_call.1} parent=51 // pred_region
          %s413 = sand.u32 %s141, 1
          %s414 = scalar_lea.sflag [#allocation4], %s413
          %s415 = sand.u32 %s141, 1
          %s416 = smul.addr %s415, 64
          %s417 = scalar_lea.vmem [#allocation5], %s416
          %418 = dma.done %s414, 1024
        $region56: #{tpu_custom_call.1} parent=51 // pred_fallthru
          _
      $region52: #{tpu_custom_call.1} parent=5 // pred_fallthru
        _
    $region6: #{tpu_custom_call.1} parent=1 // loop_footer
      %s21 = sadd.s32 1, %s17
    $region7: #{tpu_custom_call.1} parent=1 // loop_footer_branch
      %16 = sbr.rel target = $region3
    $region8: #{tpu_custom_call.1} parent=1 // loop_exit
      _
    %419 = vsyncpa [#allocation3], 1
    %s420 = scalar_lea.sflag [#allocation3], 1
    %421 = vsyncpa %s420, 1
    %422 = vsyncpa [#allocation4], 1
    %s423 = scalar_lea.sflag [#allocation4], 1
    %424 = vsyncpa %s423, 1

</llo_original>
